<compile_context>
chip_gen: v7x
topology: tpu7x:2x2x1
jax: 0.10.0
libtpu: 0.0.40
codegen_flags: <defaults>
</compile_context>

<pallas_src>
import jax
import jax.numpy as jnp
from jax import lax
from jax.experimental import pallas as pl
from jax.experimental.pallas import tpu as pltpu

BN_EPS = 1e-5


def mybilinear_kernel(x_ref, y_ref, w_ref, b1_ref, o_ref):
    x = x_ref[...]      # (B, N, in1)                  f32
    y = y_ref[...]      # (B, in2)                     f32
    w = w_ref[...]      # (in2*in1 + in1 + in2, out)   bf16 (stacked weight)
    b1 = b1_ref[...]    # (1, out)                     f32

    B, N, in1 = x.shape
    in2 = y.shape[1]
    rows = B * N

    # y broadcast over the N axis (sublane splat).  Hoisted once; reused both
    # for the cross-term blocks and for the li2 columns of A.
    y_b = jnp.broadcast_to(y[:, None, :], (B, N, in2))           # (B, N, in2) f32

    # Outer-product cross-term operand, built lane-dense block by block:
    #   z[b, n, k*in1 + d] = y[b, k] * x[b, n, d]
    # Each block is a size-1 lane-splat multiply; no sublane<->lane reshape of
    # runtime data is ever materialised.
    z_blocks = [y_b[:, :, k:k + 1] * x for k in range(in2)]      # in2 x (B, N, in1)

    # A = [z | x | y] so li1 + li2 + cross term become a single matmul against
    # the wrapper-stacked weight [bli_flat; W1^T; W2^T].  z (the 128-aligned
    # 512-lane slab) goes first; x / y trail at lane offsets 512 / 544.
    a3 = jnp.concatenate(z_blocks + [x, y_b], axis=-1)           # (B, N, K) f32
    a = a3.reshape(rows, a3.shape[-1])                           # leading-dim merge (free)

    # Single deep-K MXU matmul: bf16 operands, f32 accumulation.
    res = jnp.dot(a.astype(jnp.bfloat16), w,
                  preferred_element_type=jnp.float32) + b1       # (rows, out) f32

    # BatchNorm1d, training mode, biased variance, gamma=1 / beta=0.
    # Two-pass statistics (mean, then centered sum of squares).
    inv_n = 1.0 / float(rows)
    mean = jnp.sum(res, axis=0, keepdims=True) * inv_n           # (1, out)
    centered = res - mean
    var = jnp.sum(centered * centered, axis=0, keepdims=True) * inv_n

    # Activation: Identity (activation=None default).
    o_ref[...] = (centered * lax.rsqrt(var + BN_EPS)).astype(o_ref.dtype)


def mybilinear_forward(x, y, w1_t, b1, w2_t, bli2d):
    """x: (B,N,in1) f32, y: (B,in2) f32, w1_t: (in1,out), b1: (1,out),
    w2_t: (in2,out), bli2d: (in2, in1*out) in PyTorch parameter memory order.
    Returns (B, N, out) f32."""
    B, N, in1 = x.shape
    in2 = y.shape[1]
    out_features = w1_t.shape[1]
    rows = B * N

    # Stacked weight for the single fused matmul.  Row order matches the
    # kernel's A = [z | x | y] lane order:
    #   rows [0, in2*in1)           : bli, row (k*in1 + d) holds bli[k, d*out + o]
    #                                 (consistent with PyTorch's (in2, in1*out)
    #                                 row-major parameter layout)
    #   rows [in2*in1, +in1)        : W1^T   (in1, out)
    #   rows [in2*in1+in1, +in2)    : W2^T   (in2, out)
    # bf16 cast halves the dominant (bli) HBM/VMEM traffic; matmul accumulates
    # in f32 inside the kernel.
    bli_flat = bli2d.reshape(in2, in1, out_features).reshape(in2 * in1, out_features)
    w_stack = jnp.concatenate([bli_flat, w1_t, w2_t], axis=0).astype(jnp.bfloat16)

    k_dim = in2 * in1 + in1 + in2
    cost = pl.CostEstimate(
        flops=2 * rows * k_dim * out_features        # fused matmul
              + rows * in2 * in1                     # outer-product build
              + 6 * rows * out_features,             # bias + BN elementwise
        transcendentals=out_features,                # rsqrt per feature
        bytes_accessed=(x.size + y.size + b1.size) * 4
                       + w_stack.size * 2
                       + rows * out_features * 4,
    )

    vmem = pl.BlockSpec(memory_space=pltpu.MemorySpace.VMEM)
    out2d = pl.pallas_call(
        mybilinear_kernel,
        out_shape=jax.ShapeDtypeStruct((rows, out_features), jnp.float32),
        in_specs=[vmem] * 4,
        out_specs=vmem,
        cost_estimate=cost,
    )(x, y, w_stack, b1)
    # Leading-dim reshape back to the PyTorch output shape (zero layout cost).
    return out2d.reshape(B, N, out_features)


def mybilinear_reference(x, y, w1_t, b1, w2_t, bli2d):
    """Pure-JAX f32 reference mirroring the PyTorch forward exactly."""
    B, N, in1 = x.shape
    out = w1_t.shape[1]
    res = jnp.einsum('bnd,do->bno', x, w1_t) + b1[None] + (y @ w2_t)[:, None, :]
    cy = (y @ bli2d).reshape(B, in1, out)
    res = res + jnp.einsum('bnd,bdo->bno', x, cy)
    flat = res.reshape(-1, out)
    mean = flat.mean(axis=0)
    var = ((flat - mean) ** 2).mean(axis=0)
    return ((flat - mean) / jnp.sqrt(var + BN_EPS)).reshape(res.shape)


if __name__ == "__main__":
    # Small shapes consistent with MyBilinear: x (B, N, in1), y (B, in2).
    B, N = 2, 8
    in1_features, in2_features, out_features = 32, 16, 32

    key = jax.random.PRNGKey(0)
    kx, ky, kw1, kb1, kw2, kbli = jax.random.split(key, 6)

    x = jax.random.normal(kx, (B, N, in1_features), dtype=jnp.float32)
    y = jax.random.normal(ky, (B, in2_features), dtype=jnp.float32)

    # Deterministic parameter init (shapes from nn.Linear / the bli Parameter).
    bound1 = 1.0 / (in1_features ** 0.5)
    bound2 = 1.0 / (in2_features ** 0.5)
    # nn.Linear stores (out, in); pre-transposed to (in, out) for the kernel.
    w1_t = jax.random.uniform(kw1, (in1_features, out_features),
                              minval=-bound1, maxval=bound1, dtype=jnp.float32)
    b1 = jax.random.uniform(kb1, (1, out_features),
                            minval=-bound1, maxval=bound1, dtype=jnp.float32)
    w2_t = jax.random.uniform(kw2, (in2_features, out_features),
                              minval=-bound2, maxval=bound2, dtype=jnp.float32)
    # bli parameter in its native PyTorch layout (in2, in1*out).
    bli2d = jax.random.uniform(kbli, (in2_features, in1_features * out_features),
                               minval=-bound1, maxval=bound1, dtype=jnp.float32)

    out = mybilinear_forward(x, y, w1_t, b1, w2_t, bli2d)
    out = jax.block_until_ready(out)

    ref = mybilinear_reference(x, y, w1_t, b1, w2_t, bli2d)
    assert out.shape == (B, N, out_features)
    # Tolerance: the kernel uses bf16 MXU operands (f32 accumulate); outputs
    # are BN-normalised O(1) and the expected deviation from the pure-f32
    # reference is ~1e-2 worst case, so 5e-2 still catches any structural /
    # weight-layout bug (those show up as O(1) errors).
    assert jnp.allclose(out, ref, atol=5e-2, rtol=5e-2), "mismatch vs reference"

    print("KERNEL_OK")
</pallas_src>

<mosaic_0001>
module attributes {stable_mosaic.version = 11 : i64} {
  func.func @mybilinear_kernel(%arg0: memref<2x8x32xf32, #tpu.memory_space<vmem>>, %arg1: memref<2x16xf32, #tpu.memory_space<vmem>>, %arg2: memref<560x32xbf16, #tpu.memory_space<vmem>>, %arg3: memref<1x32xf32, #tpu.memory_space<vmem>>, %arg4: memref<16x32xf32, #tpu.memory_space<vmem>>) attributes {dimension_semantics = [], scalar_prefetch = 0 : i64, scratch_operands = 0 : i64, tpu.core_type = #tpu.core_type<tc>} {
    %c0 = arith.constant 0 : index
    %c0_0 = arith.constant 0 : index
    %c0_1 = arith.constant 0 : index
    %0 = vector.load %arg0[%c0, %c0_0, %c0_1] : memref<2x8x32xf32, #tpu.memory_space<vmem>>, vector<2x8x32xf32>
    %c0_2 = arith.constant 0 : index
    %c0_3 = arith.constant 0 : index
    %1 = vector.load %arg1[%c0_2, %c0_3] : memref<2x16xf32, #tpu.memory_space<vmem>>, vector<2x16xf32>
    %c0_4 = arith.constant 0 : index
    %c0_5 = arith.constant 0 : index
    %2 = vector.load %arg2[%c0_4, %c0_5] : memref<560x32xbf16, #tpu.memory_space<vmem>>, vector<560x32xbf16>
    %c0_6 = arith.constant 0 : index
    %c0_7 = arith.constant 0 : index
    %3 = vector.load %arg3[%c0_6, %c0_7] : memref<1x32xf32, #tpu.memory_space<vmem>>, vector<1x32xf32>
    %4 = vector.shape_cast %1 : vector<2x16xf32> to vector<2x1x16xf32>
    %5 = vector.shape_cast %4 : vector<2x1x16xf32> to vector<2x1x16xf32>
    %6 = vector.broadcast %5 : vector<2x1x16xf32> to vector<2x8x16xf32>
    %7 = vector.extract_strided_slice %6 {offsets = [0, 0, 0], sizes = [2, 8, 1], strides = [1, 1, 1]} : vector<2x8x16xf32> to vector<2x8x1xf32>
    %8 = vector.broadcast %7 : vector<2x8x1xf32> to vector<2x8x32xf32>
    %9 = arith.mulf %8, %0 : vector<2x8x32xf32>
    %10 = vector.extract_strided_slice %6 {offsets = [0, 0, 1], sizes = [2, 8, 1], strides = [1, 1, 1]} : vector<2x8x16xf32> to vector<2x8x1xf32>
    %11 = vector.broadcast %10 : vector<2x8x1xf32> to vector<2x8x32xf32>
    %12 = arith.mulf %11, %0 : vector<2x8x32xf32>
    %13 = vector.extract_strided_slice %6 {offsets = [0, 0, 2], sizes = [2, 8, 1], strides = [1, 1, 1]} : vector<2x8x16xf32> to vector<2x8x1xf32>
    %14 = vector.broadcast %13 : vector<2x8x1xf32> to vector<2x8x32xf32>
    %15 = arith.mulf %14, %0 : vector<2x8x32xf32>
    %16 = vector.extract_strided_slice %6 {offsets = [0, 0, 3], sizes = [2, 8, 1], strides = [1, 1, 1]} : vector<2x8x16xf32> to vector<2x8x1xf32>
    %17 = vector.broadcast %16 : vector<2x8x1xf32> to vector<2x8x32xf32>
    %18 = arith.mulf %17, %0 : vector<2x8x32xf32>
    %19 = vector.extract_strided_slice %6 {offsets = [0, 0, 4], sizes = [2, 8, 1], strides = [1, 1, 1]} : vector<2x8x16xf32> to vector<2x8x1xf32>
    %20 = vector.broadcast %19 : vector<2x8x1xf32> to vector<2x8x32xf32>
    %21 = arith.mulf %20, %0 : vector<2x8x32xf32>
    %22 = vector.extract_strided_slice %6 {offsets = [0, 0, 5], sizes = [2, 8, 1], strides = [1, 1, 1]} : vector<2x8x16xf32> to vector<2x8x1xf32>
    %23 = vector.broadcast %22 : vector<2x8x1xf32> to vector<2x8x32xf32>
    %24 = arith.mulf %23, %0 : vector<2x8x32xf32>
    %25 = vector.extract_strided_slice %6 {offsets = [0, 0, 6], sizes = [2, 8, 1], strides = [1, 1, 1]} : vector<2x8x16xf32> to vector<2x8x1xf32>
    %26 = vector.broadcast %25 : vector<2x8x1xf32> to vector<2x8x32xf32>
    %27 = arith.mulf %26, %0 : vector<2x8x32xf32>
    %28 = vector.extract_strided_slice %6 {offsets = [0, 0, 7], sizes = [2, 8, 1], strides = [1, 1, 1]} : vector<2x8x16xf32> to vector<2x8x1xf32>
    %29 = vector.broadcast %28 : vector<2x8x1xf32> to vector<2x8x32xf32>
    %30 = arith.mulf %29, %0 : vector<2x8x32xf32>
    %31 = vector.extract_strided_slice %6 {offsets = [0, 0, 8], sizes = [2, 8, 1], strides = [1, 1, 1]} : vector<2x8x16xf32> to vector<2x8x1xf32>
    %32 = vector.broadcast %31 : vector<2x8x1xf32> to vector<2x8x32xf32>
    %33 = arith.mulf %32, %0 : vector<2x8x32xf32>
    %34 = vector.extract_strided_slice %6 {offsets = [0, 0, 9], sizes = [2, 8, 1], strides = [1, 1, 1]} : vector<2x8x16xf32> to vector<2x8x1xf32>
    %35 = vector.broadcast %34 : vector<2x8x1xf32> to vector<2x8x32xf32>
    %36 = arith.mulf %35, %0 : vector<2x8x32xf32>
    %37 = vector.extract_strided_slice %6 {offsets = [0, 0, 10], sizes = [2, 8, 1], strides = [1, 1, 1]} : vector<2x8x16xf32> to vector<2x8x1xf32>
    %38 = vector.broadcast %37 : vector<2x8x1xf32> to vector<2x8x32xf32>
    %39 = arith.mulf %38, %0 : vector<2x8x32xf32>
    %40 = vector.extract_strided_slice %6 {offsets = [0, 0, 11], sizes = [2, 8, 1], strides = [1, 1, 1]} : vector<2x8x16xf32> to vector<2x8x1xf32>
    %41 = vector.broadcast %40 : vector<2x8x1xf32> to vector<2x8x32xf32>
    %42 = arith.mulf %41, %0 : vector<2x8x32xf32>
    %43 = vector.extract_strided_slice %6 {offsets = [0, 0, 12], sizes = [2, 8, 1], strides = [1, 1, 1]} : vector<2x8x16xf32> to vector<2x8x1xf32>
    %44 = vector.broadcast %43 : vector<2x8x1xf32> to vector<2x8x32xf32>
    %45 = arith.mulf %44, %0 : vector<2x8x32xf32>
    %46 = vector.extract_strided_slice %6 {offsets = [0, 0, 13], sizes = [2, 8, 1], strides = [1, 1, 1]} : vector<2x8x16xf32> to vector<2x8x1xf32>
    %47 = vector.broadcast %46 : vector<2x8x1xf32> to vector<2x8x32xf32>
    %48 = arith.mulf %47, %0 : vector<2x8x32xf32>
    %49 = vector.extract_strided_slice %6 {offsets = [0, 0, 14], sizes = [2, 8, 1], strides = [1, 1, 1]} : vector<2x8x16xf32> to vector<2x8x1xf32>
    %50 = vector.broadcast %49 : vector<2x8x1xf32> to vector<2x8x32xf32>
    %51 = arith.mulf %50, %0 : vector<2x8x32xf32>
    %52 = vector.extract_strided_slice %6 {offsets = [0, 0, 15], sizes = [2, 8, 1], strides = [1, 1, 1]} : vector<2x8x16xf32> to vector<2x8x1xf32>
    %53 = vector.broadcast %52 : vector<2x8x1xf32> to vector<2x8x32xf32>
    %54 = arith.mulf %53, %0 : vector<2x8x32xf32>
    %55 = tpu.concatenate %9, %12, %15, %18, %21, %24, %27, %30, %33, %36, %39, %42, %45, %48, %51, %54 in 2 : vector<2x8x32xf32>, vector<2x8x32xf32>, vector<2x8x32xf32>, vector<2x8x32xf32>, vector<2x8x32xf32>, vector<2x8x32xf32>, vector<2x8x32xf32>, vector<2x8x32xf32>, vector<2x8x32xf32>, vector<2x8x32xf32>, vector<2x8x32xf32>, vector<2x8x32xf32>, vector<2x8x32xf32>, vector<2x8x32xf32>, vector<2x8x32xf32>, vector<2x8x32xf32> -> vector<2x8x512xf32>
    %56 = tpu.concatenate %0, %6 in 2 : vector<2x8x32xf32>, vector<2x8x16xf32> -> vector<2x8x48xf32>
    %57 = tpu.concatenate %55, %56 in 2 : vector<2x8x512xf32>, vector<2x8x48xf32> -> vector<2x8x560xf32>
    %58 = vector.shape_cast %57 : vector<2x8x560xf32> to vector<16x560xf32>
    %59 = arith.truncf %58 : vector<16x560xf32> to vector<16x560xbf16>
    %cst = arith.constant dense<0.000000e+00> : vector<16x32xf32>
    %60 = tpu.matmul %59, %2, %cst {dimension_numbers = #tpu.dot_dimension_numbers<[1], [0], [0], [1], [0, 0, 1, 1], [], []>} : vector<16x560xbf16>, vector<560x32xbf16>, vector<16x32xf32> -> vector<16x32xf32>
    %61 = vector.broadcast %3 : vector<1x32xf32> to vector<16x32xf32>
    %62 = arith.addf %60, %61 : vector<16x32xf32>
    %cst_8 = arith.constant dense<0.000000e+00> : vector<32xf32>
    %63 = vector.multi_reduction <add>, %62, %cst_8 [0] : vector<16x32xf32> to vector<32xf32>
    %64 = vector.shape_cast %63 : vector<32xf32> to vector<1x32xf32>
    %cst_9 = arith.constant 6.250000e-02 : f32
    %65 = vector.broadcast %cst_9 : f32 to vector<1x32xf32>
    %66 = arith.mulf %64, %65 : vector<1x32xf32>
    %67 = vector.broadcast %66 : vector<1x32xf32> to vector<16x32xf32>
    %68 = arith.subf %62, %67 : vector<16x32xf32>
    %69 = arith.mulf %68, %68 : vector<16x32xf32>
    %cst_10 = arith.constant dense<0.000000e+00> : vector<32xf32>
    %70 = vector.multi_reduction <add>, %69, %cst_10 [0] : vector<16x32xf32> to vector<32xf32>
    %71 = vector.shape_cast %70 : vector<32xf32> to vector<1x32xf32>
    %cst_11 = arith.constant 6.250000e-02 : f32
    %72 = vector.broadcast %cst_11 : f32 to vector<1x32xf32>
    %73 = arith.mulf %71, %72 : vector<1x32xf32>
    %cst_12 = arith.constant 9.99999974E-6 : f32
    %74 = vector.broadcast %cst_12 : f32 to vector<1x32xf32>
    %75 = arith.addf %73, %74 : vector<1x32xf32>
    %76 = math.rsqrt %75 : vector<1x32xf32>
    %77 = vector.broadcast %76 : vector<1x32xf32> to vector<16x32xf32>
    %78 = arith.mulf %68, %77 : vector<16x32xf32>
    %c0_13 = arith.constant 0 : index
    %c0_14 = arith.constant 0 : index
    %79 = vector.load %arg4[%c0_13, %c0_14] : memref<16x32xf32, #tpu.memory_space<vmem>>, vector<16x32xf32>
    tpu.vector_store %arg4[%c0_13, %c0_14], %78 {strides = array<i32>} : memref<16x32xf32, #tpu.memory_space<vmem>>, vector<16x32xf32>,
    return
  }
}

</mosaic_0001>

<llo_original>
// kernel: tpu_custom_call.1
$region0: #{tpu_custom_call.1}
  #allocation0 [shape = 'u32[]', space=smem, size = 0x4, offset = 0x4, fixed_abs, tag = 'smem constant byte address 0x4 - core index']
  #allocation1 [shape = 'u32[144,128]{1,0:T(1,128)}', space=vmem, size = 0x12000, scoped, tag = 'internal scratch']
  %s0 = inlined_call_operand.vmem [shape: f32[2,8,32], index: 0, kind: input, shape index: {}]
  %s1 = inlined_call_operand.vmem [shape: f32[2,16], index: 1, kind: input, shape index: {}]
  %s2 = inlined_call_operand.vmem [shape: bf16[560,32], index: 2, kind: input, shape index: {}]
  %s3 = inlined_call_operand.vmem [shape: f32[1,32], index: 3, kind: input, shape index: {}]
  %s4 = inlined_call_operand.hbm [shape: f32[16,32], index: 4, kind: output, shape index: {}]
  %s5 = sld [smem:[#allocation0]]
  $region26: #{tpu_custom_call.1} parent=0
    _
  %s7 = ssub.s32 1, %s5
  %s8 = scalar_select 0, %s7, %s5
  $region1: #{tpu_custom_call.1} parent=0
    #allocation2 [shape = 'u8[8192]{0}', space=vmem, size = 0x2000, scoped, tag = 'output window, operand 0, single buffered']
    #allocation3 [shape = 's32[1]{0}', space=sflag, size = 0x4, scoped, tag = 'scoped memory for tpu_custom_call.1']
    %9 = vsyncpa [#allocation3], 0
    // Predicated region
    $region2: #{tpu_custom_call.1} parent=1 // pred_check
      _
    $region3: #{tpu_custom_call.1} parent=1 // pred_check_branch
      %11 = sbr.rel (0) target = $region5
    $region4: #{tpu_custom_call.1} parent=1 // pred_region
      _
    $region5: #{tpu_custom_call.1} parent=1 // pred_fallthru
      _
    // Predicated region
    $region6: #{tpu_custom_call.1} parent=1 // pred_check
      _
    $region7: #{tpu_custom_call.1} parent=1 // pred_check_branch
      %13 = sbr.rel (0) target = $region9
    $region8: #{tpu_custom_call.1} parent=1 // pred_region
      _
    $region9: #{tpu_custom_call.1} parent=1 // pred_fallthru
      _
    // Predicated region
    $region10: #{tpu_custom_call.1} parent=1 // pred_check
      _
    $region11: #{tpu_custom_call.1} parent=1 // pred_check_branch
      %15 = sbr.rel (0) target = $region13
    $region12: #{tpu_custom_call.1} parent=1 // pred_region
      _
    $region13: #{tpu_custom_call.1} parent=1 // pred_fallthru
      _
    // Predicated region
    $region14: #{tpu_custom_call.1} parent=1 // pred_check
      _
    $region15: #{tpu_custom_call.1} parent=1 // pred_check_branch
      %17 = sbr.rel (0) target = $region17
    $region16: #{tpu_custom_call.1} parent=1 // pred_region
      _
    $region17: #{tpu_custom_call.1} parent=1 // pred_fallthru
      _
    %v19 = vld [vmem:[%s0] sm:$0xff]
    %v20 = vld [vmem:[%s0 + $0x8] sm:$0xff]
    %v21 = vld [vmem:[%s1] sm:$0x3]
    %v22 = vld [vmem:[%s2] sm:$0xf]
    %v23 = vld [vmem:[%s2 + $0x4] sm:$0xf]
    %v24 = vld [vmem:[%s2 + $0x8] sm:$0xf]
    %v25 = vld [vmem:[%s2 + $0xc] sm:$0xf]
    %v26 = vld [vmem:[%s2 + $0x10] sm:$0xf]
    %v27 = vld [vmem:[%s2 + $0x14] sm:$0xf]
    %v28 = vld [vmem:[%s2 + $0x18] sm:$0xf]
    %v29 = vld [vmem:[%s2 + $0x1c] sm:$0xf]
    %v30 = vld [vmem:[%s2 + $0x20] sm:$0xf]
    %v31 = vld [vmem:[%s2 + $0x24] sm:$0xf]
    %v32 = vld [vmem:[%s2 + $0x28] sm:$0xf]
    %v33 = vld [vmem:[%s2 + $0x2c] sm:$0xf]
    %v34 = vld [vmem:[%s2 + $0x30] sm:$0xf]
    %v35 = vld [vmem:[%s2 + $0x34] sm:$0xf]
    %v36 = vld [vmem:[%s2 + $0x38] sm:$0xf]
    %v37 = vld [vmem:[%s2 + $0x3c] sm:$0xf]
    %v38 = vld [vmem:[%s2 + $0x40] sm:$0xf]
    %v39 = vld [vmem:[%s2 + $0x44] sm:$0xf]
    %v40 = vld [vmem:[%s2 + $0x48] sm:$0xf]
    %v41 = vld [vmem:[%s2 + $0x4c] sm:$0xf]
    %v42 = vld [vmem:[%s2 + $0x50] sm:$0xf]
    %v43 = vld [vmem:[%s2 + $0x54] sm:$0xf]
    %v44 = vld [vmem:[%s2 + $0x58] sm:$0xf]
    %v45 = vld [vmem:[%s2 + $0x5c] sm:$0xf]
    %v46 = vld [vmem:[%s2 + $0x60] sm:$0xf]
    %v47 = vld [vmem:[%s2 + $0x64] sm:$0xf]
    %v48 = vld [vmem:[%s2 + $0x68] sm:$0xf]
    %v49 = vld [vmem:[%s2 + $0x6c] sm:$0xf]
    %v50 = vld [vmem:[%s2 + $0x70] sm:$0xf]
    %v51 = vld [vmem:[%s2 + $0x74] sm:$0xf]
    %v52 = vld [vmem:[%s2 + $0x78] sm:$0xf]
    %v53 = vld [vmem:[%s2 + $0x7c] sm:$0xf]
    %v54 = vld [vmem:[%s2 + $0x80] sm:$0xf]
    %v55 = vld [vmem:[%s2 + $0x84] sm:$0xf]
    %v56 = vld [vmem:[%s2 + $0x88] sm:$0xf]
    %v57 = vld [vmem:[%s2 + $0x8c] sm:$0xf]
    %v58 = vld [vmem:[%s2 + $0x90] sm:$0xf]
    %v59 = vld [vmem:[%s2 + $0x94] sm:$0xf]
    %v60 = vld [vmem:[%s2 + $0x98] sm:$0xf]
    %v61 = vld [vmem:[%s2 + $0x9c] sm:$0xf]
    %v62 = vld [vmem:[%s2 + $0xa0] sm:$0xf]
    %v63 = vld [vmem:[%s2 + $0xa4] sm:$0xf]
    %v64 = vld [vmem:[%s2 + $0xa8] sm:$0xf]
    %v65 = vld [vmem:[%s2 + $0xac] sm:$0xf]
    %v66 = vld [vmem:[%s2 + $0xb0] sm:$0xf]
    %v67 = vld [vmem:[%s2 + $0xb4] sm:$0xf]
    %v68 = vld [vmem:[%s2 + $0xb8] sm:$0xf]
    %v69 = vld [vmem:[%s2 + $0xbc] sm:$0xf]
    %v70 = vld [vmem:[%s2 + $0xc0] sm:$0xf]
    %v71 = vld [vmem:[%s2 + $0xc4] sm:$0xf]
    %v72 = vld [vmem:[%s2 + $0xc8] sm:$0xf]
    %v73 = vld [vmem:[%s2 + $0xcc] sm:$0xf]
    %v74 = vld [vmem:[%s2 + $0xd0] sm:$0xf]
    %v75 = vld [vmem:[%s2 + $0xd4] sm:$0xf]
    %v76 = vld [vmem:[%s2 + $0xd8] sm:$0xf]
    %v77 = vld [vmem:[%s2 + $0xdc] sm:$0xf]
    %v78 = vld [vmem:[%s2 + $0xe0] sm:$0xf]
    %v79 = vld [vmem:[%s2 + $0xe4] sm:$0xf]
    %v80 = vld [vmem:[%s2 + $0xe8] sm:$0xf]
    %v81 = vld [vmem:[%s2 + $0xec] sm:$0xf]
    %v82 = vld [vmem:[%s2 + $0xf0] sm:$0xf]
    %v83 = vld [vmem:[%s2 + $0xf4] sm:$0xf]
    %v84 = vld [vmem:[%s2 + $0xf8] sm:$0xf]
    %v85 = vld [vmem:[%s2 + $0xfc] sm:$0xf]
    %v86 = vld [vmem:[%s2 + $0x100] sm:$0xf]
    %v87 = vld [vmem:[%s2 + $0x104] sm:$0xf]
    %v88 = vld [vmem:[%s2 + $0x108] sm:$0xf]
    %v89 = vld [vmem:[%s2 + $0x10c] sm:$0xf]
    %v90 = vld [vmem:[%s2 + $0x110] sm:$0xf]
    %v91 = vld [vmem:[%s2 + $0x114] sm:$0xf]
    %v92 = vld [vmem:[%s3] sm:$0x1]
    %v95 = vunpack.c.l.s4 1966171168
    %v96 = vunpack.c.0.s8 %v95
    %v97 = vlaneseq
    %v98 = vshrl.u32 %v97, 7
    %v99 = vsub.s32 %v96, %v98
    %v100 = vrot.slane %v21, %v99
    %v101 = vcombine.high %v100, %v100
    %v103 = vunpack.c.l.s4 1966171168
    %v104 = vunpack.c.0.s8 %v103
    %v105 = vlaneseq
    %v106 = vshrl.u32 %v105, 7
    %v107 = vsub.s32 %v104, %v106
    %v108 = vrot.slane %v100, %v107
    %v110 = vunpack.c.l.s4 1966171168
    %v111 = vunpack.c.0.s8 %v110
    %v112 = vlaneseq
    %v113 = vshrl.u32 %v112, 7
    %v114 = vsub.s32 %v111, %v113
    %v115 = vrot.slane %v101, %v114
    %v116 = vlaneseq
    %v117 = vshrl.u32 %v116, 7
    %v118 = vsub.s32 0, %v117
    %v119 = vrot.slane %v108, %v118
    %v120 = vlaneseq
    %v121 = vshrl.u32 %v120, 7
    %v122 = vsub.s32 0, %v121
    %v123 = vrot.slane %v115, %v122
    %124 = vset.pattern.permute.xlu0 0
    %125 = vperm.xlu0 %124, %v119
    %v126 = vpop.permute.xlu0 %125
    %128 = vset.pattern.permute.xlu0 0
    %129 = vperm.xlu0 %128, %v123
    %v130 = vpop.permute.xlu0 %129
    %v132 = vmul.f32 %v126, %v19
    %v133 = vmul.f32 %v130, %v20
    %134 = vset.pattern.permute.xlu0 1
    %135 = vperm.xlu0 %134, %v119
    %v136 = vpop.permute.xlu0 %135
    %138 = vset.pattern.permute.xlu0 1
    %139 = vperm.xlu0 %138, %v123
    %v140 = vpop.permute.xlu0 %139
    %v142 = vmul.f32 %v136, %v19
    %v143 = vmul.f32 %v140, %v20
    %144 = vset.pattern.permute.xlu0 2
    %145 = vperm.xlu0 %144, %v119
    %v146 = vpop.permute.xlu0 %145
    %148 = vset.pattern.permute.xlu0 2
    %149 = vperm.xlu0 %148, %v123
    %v150 = vpop.permute.xlu0 %149
    %v152 = vmul.f32 %v146, %v19
    %v153 = vmul.f32 %v150, %v20
    %154 = vset.pattern.permute.xlu0 3
    %155 = vperm.xlu0 %154, %v119
    %v156 = vpop.permute.xlu0 %155
    %158 = vset.pattern.permute.xlu0 3
    %159 = vperm.xlu0 %158, %v123
    %v160 = vpop.permute.xlu0 %159
    %v162 = vmul.f32 %v156, %v19
    %v163 = vmul.f32 %v160, %v20
    %164 = vset.pattern.permute.xlu0 4
    %165 = vperm.xlu0 %164, %v119
    %v166 = vpop.permute.xlu0 %165
    %168 = vset.pattern.permute.xlu0 4
    %169 = vperm.xlu0 %168, %v123
    %v170 = vpop.permute.xlu0 %169
    %v172 = vmul.f32 %v166, %v19
    %v173 = vmul.f32 %v170, %v20
    %174 = vset.pattern.permute.xlu0 5
    %175 = vperm.xlu0 %174, %v119
    %v176 = vpop.permute.xlu0 %175
    %178 = vset.pattern.permute.xlu0 5
    %179 = vperm.xlu0 %178, %v123
    %v180 = vpop.permute.xlu0 %179
    %v182 = vmul.f32 %v176, %v19
    %v183 = vmul.f32 %v180, %v20
    %184 = vset.pattern.permute.xlu0 6
    %185 = vperm.xlu0 %184, %v119
    %v186 = vpop.permute.xlu0 %185
    %188 = vset.pattern.permute.xlu0 6
    %189 = vperm.xlu0 %188, %v123
    %v190 = vpop.permute.xlu0 %189
    %v192 = vmul.f32 %v186, %v19
    %v193 = vmul.f32 %v190, %v20
    %194 = vset.pattern.permute.xlu0 7
    %195 = vperm.xlu0 %194, %v119
    %v196 = vpop.permute.xlu0 %195
    %198 = vset.pattern.permute.xlu0 7
    %199 = vperm.xlu0 %198, %v123
    %v200 = vpop.permute.xlu0 %199
    %v202 = vmul.f32 %v196, %v19
    %v203 = vmul.f32 %v200, %v20
    %204 = vset.pattern.permute.xlu0 8
    %205 = vperm.xlu0 %204, %v119
    %v206 = vpop.permute.xlu0 %205
    %208 = vset.pattern.permute.xlu0 8
    %209 = vperm.xlu0 %208, %v123
    %v210 = vpop.permute.xlu0 %209
    %v212 = vmul.f32 %v206, %v19
    %v213 = vmul.f32 %v210, %v20
    %214 = vset.pattern.permute.xlu0 9
    %215 = vperm.xlu0 %214, %v119
    %v216 = vpop.permute.xlu0 %215
    %218 = vset.pattern.permute.xlu0 9
    %219 = vperm.xlu0 %218, %v123
    %v220 = vpop.permute.xlu0 %219
    %v222 = vmul.f32 %v216, %v19
    %v223 = vmul.f32 %v220, %v20
    %224 = vset.pattern.permute.xlu0 10
    %225 = vperm.xlu0 %224, %v119
    %v226 = vpop.permute.xlu0 %225
    %228 = vset.pattern.permute.xlu0 10
    %229 = vperm.xlu0 %228, %v123
    %v230 = vpop.permute.xlu0 %229
    %v232 = vmul.f32 %v226, %v19
    %v233 = vmul.f32 %v230, %v20
    %234 = vset.pattern.permute.xlu0 11
    %235 = vperm.xlu0 %234, %v119
    %v236 = vpop.permute.xlu0 %235
    %238 = vset.pattern.permute.xlu0 11
    %239 = vperm.xlu0 %238, %v123
    %v240 = vpop.permute.xlu0 %239
    %v242 = vmul.f32 %v236, %v19
    %v243 = vmul.f32 %v240, %v20
    %244 = vset.pattern.permute.xlu0 12
    %245 = vperm.xlu0 %244, %v119
    %v246 = vpop.permute.xlu0 %245
    %248 = vset.pattern.permute.xlu0 12
    %249 = vperm.xlu0 %248, %v123
    %v250 = vpop.permute.xlu0 %249
    %v252 = vmul.f32 %v246, %v19
    %v253 = vmul.f32 %v250, %v20
    %254 = vset.pattern.permute.xlu0 13
    %255 = vperm.xlu0 %254, %v119
    %v256 = vpop.permute.xlu0 %255
    %258 = vset.pattern.permute.xlu0 13
    %259 = vperm.xlu0 %258, %v123
    %v260 = vpop.permute.xlu0 %259
    %v262 = vmul.f32 %v256, %v19
    %v263 = vmul.f32 %v260, %v20
    %264 = vset.pattern.permute.xlu0 14
    %265 = vperm.xlu0 %264, %v119
    %v266 = vpop.permute.xlu0 %265
    %268 = vset.pattern.permute.xlu0 14
    %269 = vperm.xlu0 %268, %v123
    %v270 = vpop.permute.xlu0 %269
    %v272 = vmul.f32 %v266, %v19
    %v273 = vmul.f32 %v270, %v20
    %274 = vset.pattern.permute.xlu0 15
    %275 = vperm.xlu0 %274, %v119
    %v276 = vpop.permute.xlu0 %275
    %278 = vset.pattern.permute.xlu0 15
    %279 = vperm.xlu0 %278, %v123
    %v280 = vpop.permute.xlu0 %279
    %v282 = vmul.f32 %v276, %v19
    %v283 = vmul.f32 %v280, %v20
    %286 = vrot.lane.b32.xlu0 %v142, 32
    %v287 = vpop.permute.xlu0 %286
    %288 = vrot.lane.b32.xlu0 %v143, 32
    %v289 = vpop.permute.xlu0 %288
    %294 = vrot.lane.b32.xlu0 %v152, 64
    %v295 = vpop.permute.xlu0 %294
    %296 = vrot.lane.b32.xlu0 %v153, 64
    %v297 = vpop.permute.xlu0 %296
    %302 = vrot.lane.b32.xlu0 %v162, 96
    %v303 = vpop.permute.xlu0 %302
    %304 = vrot.lane.b32.xlu0 %v163, 96
    %v305 = vpop.permute.xlu0 %304
    %310 = vrot.lane.b32.xlu0 %v182, 32
    %v311 = vpop.permute.xlu0 %310
    %312 = vrot.lane.b32.xlu0 %v183, 32
    %v313 = vpop.permute.xlu0 %312
    %318 = vrot.lane.b32.xlu0 %v192, 64
    %v319 = vpop.permute.xlu0 %318
    %320 = vrot.lane.b32.xlu0 %v193, 64
    %v321 = vpop.permute.xlu0 %320
    %326 = vrot.lane.b32.xlu0 %v202, 96
    %v327 = vpop.permute.xlu0 %326
    %328 = vrot.lane.b32.xlu0 %v203, 96
    %v329 = vpop.permute.xlu0 %328
    %334 = vrot.lane.b32.xlu0 %v222, 32
    %v335 = vpop.permute.xlu0 %334
    %336 = vrot.lane.b32.xlu0 %v223, 32
    %v337 = vpop.permute.xlu0 %336
    %342 = vrot.lane.b32.xlu0 %v232, 64
    %v343 = vpop.permute.xlu0 %342
    %344 = vrot.lane.b32.xlu0 %v233, 64
    %v345 = vpop.permute.xlu0 %344
    %350 = vrot.lane.b32.xlu0 %v242, 96
    %v351 = vpop.permute.xlu0 %350
    %352 = vrot.lane.b32.xlu0 %v243, 96
    %v353 = vpop.permute.xlu0 %352
    %358 = vrot.lane.b32.xlu0 %v262, 32
    %v359 = vpop.permute.xlu0 %358
    %360 = vrot.lane.b32.xlu0 %v263, 32
    %v361 = vpop.permute.xlu0 %360
    %366 = vrot.lane.b32.xlu0 %v272, 64
    %v367 = vpop.permute.xlu0 %366
    %368 = vrot.lane.b32.xlu0 %v273, 64
    %v369 = vpop.permute.xlu0 %368
    %374 = vrot.lane.b32.xlu0 %v282, 96
    %v375 = vpop.permute.xlu0 %374
    %376 = vrot.lane.b32.xlu0 %v283, 96
    %v377 = vpop.permute.xlu0 %376
    %vm380 = vcmask 261120
    %v381 = vsel %vm380, %v132, %v287
    %v382 = vsel %vm380, %v133, %v289
    %vm383 = vcmask 523264
    %v384 = vsel %vm383, %v381, %v295
    %v385 = vsel %vm383, %v382, %v297
    %vm386 = vcmask 785408
    %v387 = vsel %vm386, %v384, %v303
    %v388 = vsel %vm386, %v385, %v305
    %v389 = vsel %vm380, %v172, %v311
    %v390 = vsel %vm380, %v173, %v313
    %v391 = vsel %vm383, %v389, %v319
    %v392 = vsel %vm383, %v390, %v321
    %v393 = vsel %vm386, %v391, %v327
    %v394 = vsel %vm386, %v392, %v329
    %v395 = vsel %vm380, %v212, %v335
    %v396 = vsel %vm380, %v213, %v337
    %v397 = vsel %vm383, %v395, %v343
    %v398 = vsel %vm383, %v396, %v345
    %v399 = vsel %vm386, %v397, %v351
    %v400 = vsel %vm386, %v398, %v353
    %v401 = vsel %vm380, %v252, %v359
    %v402 = vsel %vm380, %v253, %v361
    %v403 = vsel %vm383, %v401, %v367
    %v404 = vsel %vm383, %v402, %v369
    %v405 = vsel %vm386, %v403, %v375
    %v406 = vsel %vm386, %v404, %v377
    %407 = vrot.lane.b32.xlu0 %v119, 32
    %v408 = vpop.permute.xlu0 %407
    %409 = vrot.lane.b32.xlu0 %v123, 32
    %v410 = vpop.permute.xlu0 %409
    %v413 = vsel %vm380, %v19, %v408
    %v414 = vsel %vm380, %v20, %v410
    %v415 = vpack.c.bf16 %v388, %v387
    %v416 = vpack.c.bf16 %v394, %v393
    %v417 = vpack.c.bf16 %v400, %v399
    %v418 = vpack.c.bf16 %v406, %v405
    %v419 = vpack.c.bf16 %v414, %v413
    %v421 = vlaneseq
    %v422 = vshrl.u32 %v421, 7
    %v423 = vsub.s32 0, %v422
    %v424 = vrot.slane %v92, %v423
    %v496 = vunpack.c.l.b16 %v22
    %v497 = vunpack.c.l.b16 %v23
    %v498 = vunpack.c.l.b16 %v24
    %v499 = vunpack.c.l.b16 %v25
    %v500 = vunpack.c.l.b16 %v26
    %v501 = vunpack.c.l.b16 %v27
    %v502 = vunpack.c.l.b16 %v28
    %v503 = vunpack.c.l.b16 %v29
    %v504 = vunpack.c.l.b16 %v30
    %v505 = vunpack.c.l.b16 %v31
    %v506 = vunpack.c.l.b16 %v32
    %v507 = vunpack.c.l.b16 %v33
    %v508 = vunpack.c.l.b16 %v34
    %v509 = vunpack.c.l.b16 %v35
    %v510 = vunpack.c.l.b16 %v36
    %v511 = vunpack.c.l.b16 %v37
    %v512 = vunpack.c.l.b16 %v38
    %v513 = vunpack.c.l.b16 %v39
    %v514 = vunpack.c.l.b16 %v40
    %v515 = vunpack.c.l.b16 %v41
    %v516 = vunpack.c.l.b16 %v42
    %v517 = vunpack.c.l.b16 %v43
    %v518 = vunpack.c.l.b16 %v44
    %v519 = vunpack.c.l.b16 %v45
    %v520 = vunpack.c.l.b16 %v46
    %v521 = vunpack.c.l.b16 %v47
    %v522 = vunpack.c.l.b16 %v48
    %v523 = vunpack.c.l.b16 %v49
    %v524 = vunpack.c.l.b16 %v50
    %v525 = vunpack.c.l.b16 %v51
    %v526 = vunpack.c.l.b16 %v52
    %v527 = vunpack.c.l.b16 %v53
    %v528 = vunpack.c.l.b16 %v54
    %v529 = vunpack.c.l.b16 %v55
    %v530 = vunpack.c.l.b16 %v56
    %v531 = vunpack.c.l.b16 %v57
    %v532 = vunpack.c.l.b16 %v58
    %v533 = vunpack.c.l.b16 %v59
    %v534 = vunpack.c.l.b16 %v60
    %v535 = vunpack.c.l.b16 %v61
    %v536 = vunpack.c.l.b16 %v62
    %v537 = vunpack.c.l.b16 %v63
    %v538 = vunpack.c.l.b16 %v64
    %v539 = vunpack.c.l.b16 %v65
    %v540 = vunpack.c.l.b16 %v66
    %v541 = vunpack.c.l.b16 %v67
    %v542 = vunpack.c.l.b16 %v68
    %v543 = vunpack.c.l.b16 %v69
    %v544 = vunpack.c.l.b16 %v70
    %v545 = vunpack.c.l.b16 %v71
    %v546 = vunpack.c.l.b16 %v72
    %v547 = vunpack.c.l.b16 %v73
    %v548 = vunpack.c.l.b16 %v74
    %v549 = vunpack.c.l.b16 %v75
    %v550 = vunpack.c.l.b16 %v76
    %v551 = vunpack.c.l.b16 %v77
    %v552 = vunpack.c.l.b16 %v78
    %v553 = vunpack.c.l.b16 %v79
    %v554 = vunpack.c.l.b16 %v80
    %v555 = vunpack.c.l.b16 %v81
    %v556 = vunpack.c.l.b16 %v82
    %v557 = vunpack.c.l.b16 %v83
    %v558 = vunpack.c.l.b16 %v84
    %v559 = vunpack.c.l.b16 %v85
    %v560 = vunpack.c.l.b16 %v86
    %v561 = vunpack.c.l.b16 %v87
    %v562 = vunpack.c.l.b16 %v88
    %v563 = vunpack.c.l.b16 %v89
    %v564 = vunpack.c.l.b16 %v90
    %v565 = vunpack.c.l.b16 %v91
    %v566 = vpack.c.b16 %v497, %v496
    %v567 = vpack.c.b16 %v499, %v498
    %v568 = vpack.c.b16 %v501, %v500
    %v569 = vpack.c.b16 %v503, %v502
    %v570 = vpack.c.b16 %v505, %v504
    %v571 = vpack.c.b16 %v507, %v506
    %v572 = vpack.c.b16 %v509, %v508
    %v573 = vpack.c.b16 %v511, %v510
    %v574 = vpack.c.b16 %v513, %v512
    %v575 = vpack.c.b16 %v515, %v514
    %v576 = vpack.c.b16 %v517, %v516
    %v577 = vpack.c.b16 %v519, %v518
    %v578 = vpack.c.b16 %v521, %v520
    %v579 = vpack.c.b16 %v523, %v522
    %v580 = vpack.c.b16 %v525, %v524
    %v581 = vpack.c.b16 %v527, %v526
    %v582 = vpack.c.b16 %v529, %v528
    %v583 = vpack.c.b16 %v531, %v530
    %v584 = vpack.c.b16 %v533, %v532
    %v585 = vpack.c.b16 %v535, %v534
    %v586 = vpack.c.b16 %v537, %v536
    %v587 = vpack.c.b16 %v539, %v538
    %v588 = vpack.c.b16 %v541, %v540
    %v589 = vpack.c.b16 %v543, %v542
    %v590 = vpack.c.b16 %v545, %v544
    %v591 = vpack.c.b16 %v547, %v546
    %v592 = vpack.c.b16 %v549, %v548
    %v593 = vpack.c.b16 %v551, %v550
    %v594 = vpack.c.b16 %v553, %v552
    %v595 = vpack.c.b16 %v555, %v554
    %v596 = vpack.c.b16 %v557, %v556
    %v597 = vpack.c.b16 %v559, %v558
    %v598 = vpack.c.b16 %v561, %v560
    %v599 = vpack.c.b16 %v563, %v562
    %v600 = vpack.c.b16 %v565, %v564
    %vm636 = vcmask 392192
    %v638 = vsel %vm636, %v419, 0
    %640 = vmatprep.subr.bf16.mxu0 0
    %641 = vmatpush1.bf16.msra.mxu0 %v566
    %642 = vmatprep.subr.bf16.mxu0 0
    %643 = vmatpush1.bf16.msra.mxu0 %v567
    %644 = vmatprep.subr.bf16.mxu0 0
    %645 = vmatpush1.bf16.msra.mxu0 %v568
    %646 = vmatprep.subr.bf16.mxu0 0
    %647 = vmatpush1.bf16.msra.mxu0 %v569
    %648 = vmatprep.subr.bf16.mxu0 0
    %649 = vmatpush1.bf16.msra.mxu0 %v570
    %650 = vmatprep.subr.bf16.mxu0 0
    %651 = vmatpush1.bf16.msra.mxu0 %v571
    %652 = vmatprep.subr.bf16.mxu0 0
    %653 = vmatpush1.bf16.msra.mxu0 %v572
    %654 = vmatprep.subr.bf16.mxu0 0
    %655 = vmatpush1.bf16.msra.mxu0 %v573
    %656 = vmatprep.subr.bf16.mxu0 0
    %657 = vmatpush1.bf16.msra.mxu0 %v574
    %658 = vmatprep.subr.bf16.mxu0 0
    %659 = vmatpush1.bf16.msra.mxu0 %v575
    %660 = vmatprep.subr.bf16.mxu0 0
    %661 = vmatpush1.bf16.msra.mxu0 %v576
    %662 = vmatprep.subr.bf16.mxu0 0
    %663 = vmatpush1.bf16.msra.mxu0 %v577
    %664 = vmatprep.subr.bf16.mxu0 0
    %665 = vmatpush1.bf16.msra.mxu0 %v578
    %666 = vmatprep.subr.bf16.mxu0 0
    %667 = vmatpush1.bf16.msra.mxu0 %v579
    %668 = vmatprep.subr.bf16.mxu0 0
    %669 = vmatpush1.bf16.msra.mxu0 %v580
    %670 = vmatprep.subr.bf16.mxu0 0
    %671 = vmatpush1.bf16.msra.mxu0 %v581
    %672 = vmatprep.mubr.bf16.mxu0 %v416
    %673 = vmatmul.mubr.bf16.gmra.mrb[0].mxu0 %v415
    %v674 = vpop.f32.mrb[0].mxu0
    %v675 = vadd.f32 %v424, %v674
    %v676 = vpop.f32.mrb[0].mxu0
    %v677 = vpop.f32.mrb[0].mxu0
    %v678 = vadd.f32 %v424, %v677
    %v679 = vpop.f32.mrb[0].mxu0
    %680 = vdwg.mxu0
    %681 = vmatprep.subr.bf16.mxu0 0
    %682 = vmatpush1.bf16.msra.mxu0 %v582
    %683 = vmatprep.subr.bf16.mxu0 0
    %684 = vmatpush1.bf16.msra.mxu0 %v583
    %685 = vmatprep.subr.bf16.mxu0 0
    %686 = vmatpush1.bf16.msra.mxu0 %v584
    %687 = vmatprep.subr.bf16.mxu0 0
    %688 = vmatpush1.bf16.msra.mxu0 %v585
    %689 = vmatprep.subr.bf16.mxu0 0
    %690 = vmatpush1.bf16.msra.mxu0 %v586
    %691 = vmatprep.subr.bf16.mxu0 0
    %692 = vmatpush1.bf16.msra.mxu0 %v587
    %693 = vmatprep.subr.bf16.mxu0 0
    %694 = vmatpush1.bf16.msra.mxu0 %v588
    %695 = vmatprep.subr.bf16.mxu0 0
    %696 = vmatpush1.bf16.msra.mxu0 %v589
    %697 = vmatprep.subr.bf16.mxu0 0
    %698 = vmatpush1.bf16.msra.mxu0 %v590
    %699 = vmatprep.subr.bf16.mxu0 0
    %700 = vmatpush1.bf16.msra.mxu0 %v591
    %701 = vmatprep.subr.bf16.mxu0 0
    %702 = vmatpush1.bf16.msra.mxu0 %v592
    %703 = vmatprep.subr.bf16.mxu0 0
    %704 = vmatpush1.bf16.msra.mxu0 %v593
    %705 = vmatprep.subr.bf16.mxu0 0
    %706 = vmatpush1.bf16.msra.mxu0 %v594
    %707 = vmatprep.subr.bf16.mxu0 0
    %708 = vmatpush1.bf16.msra.mxu0 %v595
    %709 = vmatprep.subr.bf16.mxu0 0
    %710 = vmatpush1.bf16.msra.mxu0 %v596
    %711 = vmatprep.subr.bf16.mxu0 0
    %712 = vmatpush1.bf16.msra.mxu0 %v597
    %713 = vmatprep.mubr.bf16.mxu0 %v418
    %714 = vmatmul.mubr.bf16.gmra.mrb[0].mxu0 %v417
    %v715 = vpop.f32.mrb[0].mxu0
    %v716 = vadd.f32 %v675, %v715
    %v717 = vpop.f32.mrb[0].mxu0
    %v718 = vpop.f32.mrb[0].mxu0
    %v719 = vadd.f32 %v678, %v718
    %v720 = vpop.f32.mrb[0].mxu0
    %721 = vdwg.mxu0
    %722 = vmatprep.subr.bf16.mxu0 0
    %723 = vmatpush1.bf16.msra.mxu0 %v598
    %724 = vmatprep.subr.bf16.mxu0 0
    %725 = vmatpush1.bf16.msra.mxu0 %v599
    %726 = vmatprep.subr.bf16.mxu0 0
    %727 = vmatpush1.bf16.msra.mxu0 %v600
    %728 = vmatprep.subr.bf16.mxu0 0
    %729 = vmatpush1.bf16.msra.mxu0 0
    %730 = vmatprep.subr.bf16.mxu0 0
    %731 = vmatpush1.bf16.msra.mxu0 0
    %732 = vmatprep.subr.bf16.mxu0 0
    %733 = vmatpush1.bf16.msra.mxu0 0
    %734 = vmatprep.subr.bf16.mxu0 0
    %735 = vmatpush1.bf16.msra.mxu0 0
    %736 = vmatprep.subr.bf16.mxu0 0
    %737 = vmatpush1.bf16.msra.mxu0 0
    %738 = vmatprep.subr.bf16.mxu0 0
    %739 = vmatpush1.bf16.msra.mxu0 0
    %740 = vmatprep.subr.bf16.mxu0 0
    %741 = vmatpush1.bf16.msra.mxu0 0
    %742 = vmatprep.subr.bf16.mxu0 0
    %743 = vmatpush1.bf16.msra.mxu0 0
    %744 = vmatprep.subr.bf16.mxu0 0
    %745 = vmatpush1.bf16.msra.mxu0 0
    %746 = vmatprep.subr.bf16.mxu0 0
    %747 = vmatpush1.bf16.msra.mxu0 0
    %748 = vmatprep.subr.bf16.mxu0 0
    %749 = vmatpush1.bf16.msra.mxu0 0
    %750 = vmatprep.subr.bf16.mxu0 0
    %751 = vmatpush1.bf16.msra.mxu0 0
    %752 = vmatprep.subr.bf16.mxu0 0
    %753 = vmatpush1.bf16.msra.mxu0 0
    %754 = vmatprep.mubr.bf16.mxu0 0
    %755 = vmatmul.mubr.bf16.gmra.mrb[0].mxu0 %v638
    %v756 = vpop.f32.mrb[0].mxu0
    %v757 = vadd.f32 %v716, %v756
    %v758 = vpop.f32.mrb[0].mxu0
    %v759 = vpop.f32.mrb[0].mxu0
    %v760 = vadd.f32 %v719, %v759
    %v761 = vpop.f32.mrb[0].mxu0
    %762 = vdwg.mxu0
    %v763 = vsel %vm380, %v757, 0.0
    %v764 = vsel %vm380, %v760, 0.0
    %v765 = vadd.f32 %v763, %v764
    %v766 = vrot.slane %v765, 4
    %v767 = vadd.f32 %v765, %v766
    %v768 = vrot.slane %v767, 2
    %v769 = vadd.f32 %v767, %v768
    %v770 = vrot.slane %v769, 1
    %v771 = vadd.f32 %v769, %v770
    %v772 = vmul.f32 %v771, 0.0625
    %v773 = vsub.f32 %v757, %v772
    %v774 = vsub.f32 %v760, %v772
    %v775 = vmul.f32 %v773, %v773
    %v776 = vmul.f32 %v774, %v774
    %v777 = vsel %vm380, %v775, 0.0
    %v778 = vsel %vm380, %v776, 0.0
    %v779 = vadd.f32 %v777, %v778
    %v780 = vrot.slane %v779, 4
    %v781 = vadd.f32 %v779, %v780
    %v782 = vrot.slane %v781, 2
    %v783 = vadd.f32 %v781, %v782
    %v784 = vrot.slane %v783, 1
    %v785 = vadd.f32 %v783, %v784
    %v786 = vmul.f32 %v785, 0.0625
    %v787 = vadd.f32 %v786, 1e-05
    %v788 = vrsqrt.pop %v787
    %v789 = vmul.f32 %v773, %v788
    %v790 = vmul.f32 %v774, %v788
    %791 = vst.msk [vmem:[#allocation2] sm:$0xff] %vm380, %v789
    %792 = vst.msk [vmem:[#allocation2 + $0x8] sm:$0xff] %vm380, %v790
    // Predicated region
    $region18: #{tpu_custom_call.1} parent=1 // pred_check
      _
    $region19: #{tpu_custom_call.1} parent=1 // pred_check_branch
      %794 = sbr.rel (0) target = $region21
    $region20: #{tpu_custom_call.1} parent=1 // pred_region
      %s796 = ssub.s32 256, 256
      %797 = vsyncadd [#allocation3], %s796
      %s798 = sshll.u32 [#allocation2], 4
      %s799 = int_to_ptr.vmem [resolvable:$true] %s798
      %804 = dma.vmem_to_hbm [thread:$0]  %s799, 256, %s4, [#allocation3], 128, 128, 8
    $region21: #{tpu_custom_call.1} parent=1 // pred_fallthru
      _
    // Predicated region
    $region22: #{tpu_custom_call.1} parent=1 // pred_check
      _
    $region23: #{tpu_custom_call.1} parent=1 // pred_check_branch
      %806 = sbr.rel (0) target = $region25
    $region24: #{tpu_custom_call.1} parent=1 // pred_region
      %807 = dma.done [#allocation3], 256
    $region25: #{tpu_custom_call.1} parent=1 // pred_fallthru
      _
    %808 = vsyncpa [#allocation3], 1

</llo_original>
